<compile_context>
chip_gen: v7x
topology: tpu7x:2x2x1
jax: 0.10.0
libtpu: 0.0.40
codegen_flags: <defaults>
</compile_context>

<pallas_src>
import math
import functools

import jax
import jax.numpy as jnp
from jax import lax
from jax.experimental import pallas as pl
from jax.experimental.pallas import tpu as pltpu


# ----------------------------------------------------------------------------
# helpers
# ----------------------------------------------------------------------------
def _pick_tile(dim, target, align):
    """Largest legal block size <= target: either the full dim, or an
    `align`-multiple that divides `dim` (keeps (8,128) BlockSpec constraints)."""
    if dim <= target:
        return dim
    t = (target // align) * align
    while t >= align:
        if dim % t == 0:
            return t
        t -= align
    return dim  # fall back to the full (always-legal) dimension


def _physical_vmem_bytes():
    """Per-core VMEM capacity; conservative (v7x) fallback if unavailable."""
    try:
        info = pltpu.get_tpu_info()
        v = getattr(info, "vmem_capacity_bytes", None)
        if v:
            return int(v)
    except Exception:
        pass
    return 64 << 20


def _vmem_limit(live_bytes):
    """Scoped-VMEM request derived from the real live set, clamped so it always
    leaves headroom for Mosaic internal scratch (v7x: 64 MiB physical -> cap at
    48 MiB; v5e/v6e: 128 MiB physical -> cap at 100 MiB)."""
    phys = _physical_vmem_bytes()
    cap = min(phys - (16 << 20), 100 << 20)
    want = int(live_bytes) + (8 << 20)
    return int(min(max(want, 32 << 20), cap))


def _pick_head_block(h, d_k):
    """Smallest group of heads whose packed width (g*d_k) is lane-aligned (x128)."""
    for g in range(1, h + 1):
        if h % g == 0 and (g * d_k) % 128 == 0:
            return g
    return None


# ----------------------------------------------------------------------------
# Kernel 1: tiled linear layer  y = x @ w_t + b   (w_t pre-transposed at init)
# ----------------------------------------------------------------------------
def _linear_kernel(x_ref, wt_ref, b_ref, o_ref, acc_ref):
    # x_ref: (tm, tk), wt_ref: (tk, tn), b_ref: (1, tn), o_ref: (tm, tn)
    @pl.when(pl.program_id(2) == 0)
    def _init():
        acc_ref[...] = jnp.zeros_like(acc_ref)

    acc_ref[...] += jnp.dot(
        x_ref[...], wt_ref[...], preferred_element_type=jnp.float32
    )

    @pl.when(pl.program_id(2) == pl.num_programs(2) - 1)
    def _finalize():
        o_ref[...] = (acc_ref[...] + b_ref[...].astype(jnp.float32)).astype(o_ref.dtype)


def linear(x, w_t, b, *, tm=512, tn=512, tk=512):
    """x: (M, K), w_t: (K, N) (already transposed once at init), b: (N,) -> (M, N)."""
    M, K = x.shape
    K2, N = w_t.shape
    assert K == K2
    tm = _pick_tile(M, tm, 8)
    tn = _pick_tile(N, tn, 128)
    tk = _pick_tile(K, tk, 128)
    b2 = b.reshape(1, N)

    itemsize = jnp.dtype(x.dtype).itemsize
    # double-buffered I/O blocks + f32 accumulator scratch
    live = 2 * (tm * tk + tk * tn + tn + tm * tn) * itemsize + tm * tn * 4

    return pl.pallas_call(
        _linear_kernel,
        out_shape=jax.ShapeDtypeStruct((M, N), x.dtype),
        grid=(M // tm, N // tn, K // tk),
        in_specs=[
            pl.BlockSpec((tm, tk), lambda i, j, k: (i, k)),
            pl.BlockSpec((tk, tn), lambda i, j, k: (k, j)),
            pl.BlockSpec((1, tn), lambda i, j, k: (0, j)),
        ],
        out_specs=pl.BlockSpec((tm, tn), lambda i, j, k: (i, j)),
        scratch_shapes=[pltpu.VMEM((tm, tn), jnp.float32)],
        compiler_params=pltpu.CompilerParams(
            dimension_semantics=("parallel", "parallel", "arbitrary"),
            vmem_limit_bytes=_vmem_limit(live),
        ),
    )(x, w_t, b2)


# ----------------------------------------------------------------------------
# Kernel 2: scaled dot-product attention over head-groups packed along lanes
# ----------------------------------------------------------------------------
def _mha_attn_kernel(q_ref, k_ref, v_ref, o_ref, *, n_heads, d_k, mxu_dtype):
    # q_ref/o_ref: (1, tq, g*d_k);  k_ref/v_ref: (1, S, g*d_k).  Head gi owns
    # columns [gi*d_k, (gi+1)*d_k) (same layout as the reference
    # .view(B,S,h,d_k) split -> no transposes are ever materialized).
    # The 1/sqrt(d_k) scale is pre-folded into the query projection weights.
    q_all = q_ref[0, :, :].astype(mxu_dtype)   # one lane-dense load, (tq, gd)
    k_all = k_ref[0, :, :].astype(mxu_dtype)   # (S, gd)
    v_all = v_ref[0, :, :].astype(mxu_dtype)   # (S, gd)

    outs = []
    for gi in range(n_heads):                  # small, statically unrolled
        cols = slice(gi * d_k, (gi + 1) * d_k)
        q_g = q_all[:, cols]                   # in-register slice, (tq, d_k)
        k_g = k_all[:, cols]                   # (S, d_k)
        v_g = v_all[:, cols]                   # (S, d_k)

        # scores = q_g @ k_g^T without materializing a transpose.
        s = lax.dot_general(
            q_g, k_g,
            dimension_numbers=(((1,), (1,)), ((), ())),
            preferred_element_type=jnp.float32,
        )                                      # (tq, S) f32

        # softmax over the last axis (matches F.softmax(scores, dim=-1))
        m = jnp.max(s, axis=-1, keepdims=True)
        p = jnp.exp(s - m)
        denom = jnp.sum(p, axis=-1, keepdims=True)
        r = pl.reciprocal(denom, approx=True)  # EUP slot (~free after exp)
        r = r * (2.0 - denom * r)              # one Newton step -> near exact
        p = (p * r).astype(mxu_dtype)
        # TODO(synk): dropout(p_attn) not implemented (eval-mode identity).

        outs.append(jnp.dot(p, v_g, preferred_element_type=jnp.float32))  # (tq, d_k)

    # ONE full-width lane-dense store (no masked per-head partial stores).
    o_ref[0, :, :] = jnp.concatenate(outs, axis=-1).astype(o_ref.dtype)


def mha_attention(q_arr, k_arr, v_arr, *, h, d_k, g, q_off, k_off, v_off,
                  out_dtype, mxu_dtype=jnp.bfloat16, tq_target=256):
    """Multi-head scaled-dot-product attention.

    q_arr/k_arr/v_arr: (B, S, *) slabs with heads packed contiguously along the
    last dim.  `*_off` are block offsets (units of g*d_k columns) locating the
    q/k/v sections inside their slab, so fused (B,S,3D) / (B,S,2D) projection
    slabs are consumed in place with zero transposes/copies.
    Returns (B, S, h*d_k) already in the transpose(1,2).view(B,S,h*d_k) layout.
    """
    B, S = q_arr.shape[0], q_arr.shape[1]
    D = h * d_k
    gd = g * d_k
    n_blocks = h // g
    tq = _pick_tile(S, tq_target, 8)
    n_q = S // tq

    kern = functools.partial(_mha_attn_kernel, n_heads=g, d_k=d_k,
                             mxu_dtype=mxu_dtype)

    itemsize = jnp.dtype(q_arr.dtype).itemsize
    mxu_item = jnp.dtype(mxu_dtype).itemsize
    # Live set: double-buffered q/o blocks + double-buffered k/v blocks
    # + per-head score temps (s, exp(s-m), cast p) + accumulated head outputs.
    live = (2 * (2 * tq * gd + 2 * S * gd) * itemsize
            + tq * S * (4 + 4 + mxu_item)
            + tq * gd * 4)

    return pl.pallas_call(
        kern,
        out_shape=jax.ShapeDtypeStruct((B, S, D), out_dtype),
        grid=(B, n_blocks, n_q),
        in_specs=[
            pl.BlockSpec((1, tq, gd), lambda b, i, qi: (b, qi, q_off + i)),
            pl.BlockSpec((1, S, gd), lambda b, i, qi: (b, 0, k_off + i)),
            pl.BlockSpec((1, S, gd), lambda b, i, qi: (b, 0, v_off + i)),
        ],
        out_specs=pl.BlockSpec((1, tq, gd), lambda b, i, qi: (b, qi, i)),
        compiler_params=pltpu.CompilerParams(
            dimension_semantics=("parallel", "parallel", "parallel"),
            vmem_limit_bytes=_vmem_limit(live),
        ),
    )(q_arr, k_arr, v_arr)


# ----------------------------------------------------------------------------
# MultiHeadedAttention forward
# ----------------------------------------------------------------------------
def multi_headed_attention(query, key, value, params, h, mask=None, *,
                           mxu_dtype=jnp.bfloat16,
                           qkv_shared=None, kv_shared=None):
    """query/key/value: (B, S, d_model).  `params` must come from prepare_params().

    mxu_dtype: operand dtype for the attention matmuls (f32 accumulation kept).
    qkv_shared / kv_shared: optional caller flags to force the fused projection
    paths for equal-but-not-identical tensors (default: object-identity check).
    """
    # TODO(synk): `mask` argument not implemented (forward exercised with mask=None).
    assert mask is None
    B, S, D = query.shape
    assert D % h == 0
    d_k = D // h

    g = _pick_head_block(h, d_k)
    g_ok = g is not None
    if qkv_shared is None:
        qkv_shared = (query is key) and (key is value)
    if kv_shared is None:
        kv_shared = key is value

    if g_ok and qkv_shared:
        # Single fused projection: reads the activation from HBM once, produces
        # the (B, S, 3D) slab; attention indexes it in place.
        qkv = linear(query.reshape(B * S, D), params["w_qkv_t"], params["b_qkv"])
        qkv = qkv.reshape(B, S, 3 * D)  # free reshape, no transpose
        nb = h // g
        x = mha_attention(qkv, qkv, qkv, h=h, d_k=d_k, g=g,
                          q_off=0, k_off=nb, v_off=2 * nb,
                          out_dtype=query.dtype, mxu_dtype=mxu_dtype)
    elif g_ok and kv_shared:
        # Fused K/V projection: reads the key/value activation from HBM once.
        q = linear(query.reshape(B * S, D), params["wq_t"], params["bq_s"]).reshape(B, S, D)
        kv = linear(key.reshape(B * S, D), params["w_kv_t"], params["b_kv"]).reshape(B, S, 2 * D)
        nb = h // g
        x = mha_attention(q, kv, kv, h=h, d_k=d_k, g=g,
                          q_off=0, k_off=0, v_off=nb,
                          out_dtype=query.dtype, mxu_dtype=mxu_dtype)
    else:
        if not g_ok:
            g = h  # all heads in one block (block width == D == full slab dim)
        q = linear(query.reshape(B * S, D), params["wq_t"], params["bq_s"]).reshape(B, S, D)
        k = linear(key.reshape(B * S, D), params["wk_t"], params["bk"]).reshape(B, S, D)
        v = linear(value.reshape(B * S, D), params["wv_t"], params["bv"]).reshape(B, S, D)
        x = mha_attention(q, k, v, h=h, d_k=d_k, g=g,
                          q_off=0, k_off=0, v_off=0,
                          out_dtype=query.dtype, mxu_dtype=mxu_dtype)

    # x is already (B, S, h*d_k) in the transpose(1,2).contiguous().view layout.
    out = linear(x.reshape(B * S, D), params["wo_t"], params["bo"])
    return out.reshape(B, S, D)


# ----------------------------------------------------------------------------
# Parameters (PyTorch nn.Linear layout) + one-time preparation
# ----------------------------------------------------------------------------
def init_params(key, d_model):
    """nn.Linear default init: U(-1/sqrt(in), 1/sqrt(in)); weights are (out, in)."""
    bound = 1.0 / math.sqrt(d_model)
    names = ["wq", "bq", "wk", "bk", "wv", "bv", "wo", "bo"]
    params = {}
    keys = jax.random.split(key, len(names))
    for n, k in zip(names, keys):
        shape = (d_model, d_model) if n.startswith("w") else (d_model,)
        params[n] = jax.random.uniform(k, shape, dtype=jnp.float32,
                                       minval=-bound, maxval=bound)
    return params


def prepare_params(params, h):
    """One-time prep (at init, not per call): pre-transpose weights, fold the
    1/sqrt(d_k) softmax scale into the query projection, and build the fused
    QKV / KV weights so the forward pass never transposes or re-reads weights."""
    d_model = params["wq"].shape[0]
    assert d_model % h == 0
    scale = 1.0 / math.sqrt(d_model // h)
    p = dict(params)
    p["wq_t"] = params["wq"].T * scale        # scale folded into q projection
    p["bq_s"] = params["bq"] * scale
    p["wk_t"] = params["wk"].T
    p["wv_t"] = params["wv"].T
    p["wo_t"] = params["wo"].T
    p["w_qkv_t"] = jnp.concatenate([p["wq_t"], p["wk_t"], p["wv_t"]], axis=1)  # (D, 3D)
    p["b_qkv"] = jnp.concatenate([p["bq_s"], params["bk"], params["bv"]], axis=0)
    p["w_kv_t"] = jnp.concatenate([p["wk_t"], p["wv_t"]], axis=1)              # (D, 2D)
    p["b_kv"] = jnp.concatenate([params["bk"], params["bv"]], axis=0)
    return p


# ----------------------------------------------------------------------------
# demo / correctness check
# ----------------------------------------------------------------------------
if __name__ == "__main__":
    B, S, d_model, h = 2, 8, 128, 4   # d_k = 32 (lane-aligned head group = 4 heads)

    root = jax.random.PRNGKey(0)
    kq, kk, kv, kp = jax.random.split(root, 4)
    query = jax.random.normal(kq, (B, S, d_model), dtype=jnp.float32)
    key = jax.random.normal(kk, (B, S, d_model), dtype=jnp.float32)
    value = jax.random.normal(kv, (B, S, d_model), dtype=jnp.float32)
    params = prepare_params(init_params(kp, d_model), h)

    def ref_forward(q_in, k_in, v_in, p, nh):
        Bn, Sn, Dn = q_in.shape
        dk = Dn // nh

        def lin(x, w, b):
            return x @ w.T + b

        def split(x):
            return x.reshape(Bn, Sn, nh, dk).transpose(0, 2, 1, 3)

        qh = split(lin(q_in, p["wq"], p["bq"]))
        kh = split(lin(k_in, p["wk"], p["bk"]))
        vh = split(lin(v_in, p["wv"], p["bv"]))
        sc = jnp.einsum("bhqd,bhkd->bhqk", qh, kh) / math.sqrt(dk)
        pa = jax.nn.softmax(sc, axis=-1)
        xh = jnp.einsum("bhqk,bhkd->bhqd", pa, vh)
        xh = xh.transpose(0, 2, 1, 3).reshape(Bn, Sn, Dn)
        return lin(xh, p["wo"], p["bo"])

    # 1) cross-attention path (distinct q/k/v), f32 MXU -> tight structural check
    out = multi_headed_attention(query, key, value, params, h,
                                 mxu_dtype=jnp.float32)
    out = jax.block_until_ready(out)
    assert out.shape == (B, S, d_model)
    assert bool(jnp.all(jnp.isfinite(out)))
    ref = ref_forward(query, key, value, params, h)
    assert bool(jnp.allclose(out, ref, atol=1e-4, rtol=1e-4)), \
        f"cross-attn (f32) max err {float(jnp.max(jnp.abs(out - ref)))}"

    # 2) shared key/value path (fused KV projection), bf16 MXU operands
    out_kv = multi_headed_attention(query, key, key, params, h)
    out_kv = jax.block_until_ready(out_kv)
    ref_kv = ref_forward(query, key, key, params, h)
    assert bool(jnp.allclose(out_kv, ref_kv, atol=3e-2, rtol=3e-2)), \
        f"kv-shared (bf16) max err {float(jnp.max(jnp.abs(out_kv - ref_kv)))}"

    # 3) self-attention path (fused QKV projection), bf16 MXU operands
    out_self = multi_headed_attention(query, query, query, params, h)
    out_self = jax.block_until_ready(out_self)
    ref_self = ref_forward(query, query, query, params, h)
    assert bool(jnp.allclose(out_self, ref_self, atol=3e-2, rtol=3e-2)), \
        f"self-attn (bf16) max err {float(jnp.max(jnp.abs(out_self - ref_self)))}"

    print("KERNEL_OK")
</pallas_src>

<mosaic_0001>
module attributes {stable_mosaic.version = 11 : i64} {
  func.func @_linear_kernel(%arg0: i32, %arg1: i32, %arg2: i32, %arg3: memref<16x128xf32, #tpu.memory_space<vmem>>, %arg4: memref<128x128xf32, #tpu.memory_space<vmem>>, %arg5: memref<1x128xf32, #tpu.memory_space<vmem>>, %arg6: memref<16x128xf32, #tpu.memory_space<vmem>>, %arg7: memref<16x128xf32, #tpu.memory_space<vmem>>) attributes {dimension_semantics = [#tpu.dimension_semantics<parallel>, #tpu.dimension_semantics<parallel>, #tpu.dimension_semantics<arbitrary>], iteration_bounds = array<i64: 1, 1, 1>, scalar_prefetch = 0 : i64, scratch_operands = 1 : i64, tpu.core_type = #tpu.core_type<tc>, window_params = [{transform_indices = @transform_0, window_bounds = array<i64: 16, 128>}, {transform_indices = @transform_1, window_bounds = array<i64: 128, 128>}, {transform_indices = @transform_2, window_bounds = array<i64: 1, 128>}, {transform_indices = @transform_3, window_bounds = array<i64: 16, 128>}]} {
    %c0_i32 = arith.constant 0 : i32
    %0 = arith.cmpi eq, %arg2, %c0_i32 : i32
    %1 = arith.extui %0 : i1 to i32
    %c0_i32_0 = arith.constant 0 : i32
    %2 = arith.cmpi ne, %1, %c0_i32_0 : i32
    scf.if %2 {
      %cst_10 = arith.constant 0.000000e+00 : f32
      %12 = vector.broadcast %cst_10 : f32 to vector<16x128xf32>
      %c0_11 = arith.constant 0 : index
      %c0_12 = arith.constant 0 : index
      %13 = vector.load %arg7[%c0_11, %c0_12] : memref<16x128xf32, #tpu.memory_space<vmem>>, vector<16x128xf32>
      tpu.vector_store %arg7[%c0_11, %c0_12], %12 {strides = array<i32>} : memref<16x128xf32, #tpu.memory_space<vmem>>, vector<16x128xf32>,
    } else {
    }
    %c0 = arith.constant 0 : index
    %c0_1 = arith.constant 0 : index
    %3 = vector.load %arg7[%c0, %c0_1] : memref<16x128xf32, #tpu.memory_space<vmem>>, vector<16x128xf32>
    %c0_2 = arith.constant 0 : index
    %c0_3 = arith.constant 0 : index
    %4 = vector.load %arg3[%c0_2, %c0_3] : memref<16x128xf32, #tpu.memory_space<vmem>>, vector<16x128xf32>
    %c0_4 = arith.constant 0 : index
    %c0_5 = arith.constant 0 : index
    %5 = vector.load %arg4[%c0_4, %c0_5] : memref<128x128xf32, #tpu.memory_space<vmem>>, vector<128x128xf32>
    %cst = arith.constant dense<0.000000e+00> : vector<16x128xf32>
    %6 = tpu.matmul %4, %5, %cst {dimension_numbers = #tpu.dot_dimension_numbers<[1], [0], [0], [1], [0, 0, 1, 1], [], []>} : vector<16x128xf32>, vector<128x128xf32>, vector<16x128xf32> -> vector<16x128xf32>
    %7 = arith.addf %3, %6 : vector<16x128xf32>
    %c0_6 = arith.constant 0 : index
    %c0_7 = arith.constant 0 : index
    %8 = vector.load %arg7[%c0_6, %c0_7] : memref<16x128xf32, #tpu.memory_space<vmem>>, vector<16x128xf32>
    tpu.vector_store %arg7[%c0_6, %c0_7], %7 {strides = array<i32>} : memref<16x128xf32, #tpu.memory_space<vmem>>, vector<16x128xf32>,
    %c0_i32_8 = arith.constant 0 : i32
    %9 = arith.cmpi eq, %arg2, %c0_i32_8 : i32
    %10 = arith.extui %9 : i1 to i32
    %c0_i32_9 = arith.constant 0 : i32
    %11 = arith.cmpi ne, %10, %c0_i32_9 : i32
    scf.if %11 {
      %c0_10 = arith.constant 0 : index
      %c0_11 = arith.constant 0 : index
      %12 = vector.load %arg7[%c0_10, %c0_11] : memref<16x128xf32, #tpu.memory_space<vmem>>, vector<16x128xf32>
      %c0_12 = arith.constant 0 : index
      %c0_13 = arith.constant 0 : index
      %13 = vector.load %arg5[%c0_12, %c0_13] : memref<1x128xf32, #tpu.memory_space<vmem>>, vector<1x128xf32>
      %14 = vector.broadcast %13 : vector<1x128xf32> to vector<16x128xf32>
      %15 = arith.addf %12, %14 : vector<16x128xf32>
      %c0_14 = arith.constant 0 : index
      %c0_15 = arith.constant 0 : index
      %16 = vector.load %arg6[%c0_14, %c0_15] : memref<16x128xf32, #tpu.memory_space<vmem>>, vector<16x128xf32>
      tpu.vector_store %arg6[%c0_14, %c0_15], %15 {strides = array<i32>} : memref<16x128xf32, #tpu.memory_space<vmem>>, vector<16x128xf32>,
    } else {
    }
    return
  }
  func.func @transform_0(%arg0: i32, %arg1: i32, %arg2: i32) -> (i32, i32) {
    %c0_i32 = arith.constant 0 : i32
    return %arg0, %arg2 : i32, i32
  }
  func.func @transform_1(%arg0: i32, %arg1: i32, %arg2: i32) -> (i32, i32) {
    %c0_i32 = arith.constant 0 : i32
    return %arg2, %arg1 : i32, i32
  }
  func.func @transform_2(%arg0: i32, %arg1: i32, %arg2: i32) -> (i32, i32) {
    %c0_i32 = arith.constant 0 : i32
    %c0_i32_0 = arith.constant 0 : i32
    return %c0_i32, %arg1 : i32, i32
  }
  func.func @transform_3(%arg0: i32, %arg1: i32, %arg2: i32) -> (i32, i32) {
    %c0_i32 = arith.constant 0 : i32
    return %arg0, %arg1 : i32, i32
  }
}

</mosaic_0001>

<llo_original>
// kernel: tpu_custom_call.1
$region0: #{tpu_custom_call.1}
  #allocation0 [shape = 'u32[]', space=smem, size = 0x4, offset = 0x4, fixed_abs, tag = 'smem constant byte address 0x4 - core index']
  #allocation1 [shape = 'u32[144,128]{1,0:T(1,128)}', space=vmem, size = 0x12000, scoped, tag = 'internal scratch']
  #allocation2 [shape = 'f32[16,128]{1,0:T(8,128)}', space=vmem, size = 0x2000, scoped, tag = 'scratch operand']
  %s0 = inlined_call_operand.hbm [shape: f32[16,128], index: 0, kind: input, shape index: {}]
  %s1 = inlined_call_operand.hbm [shape: f32[128,128], index: 1, kind: input, shape index: {}]
  %s2 = inlined_call_operand.vmem [shape: f32[1,128], index: 2, kind: input, shape index: {}]
  %s3 = inlined_call_operand.hbm [shape: f32[16,128], index: 3, kind: output, shape index: {}]
  %s4 = sld [smem:[#allocation0]]
  $region38: #{tpu_custom_call.1} parent=0
    _
  %s6 = ssub.s32 1, %s4
  %s7 = scalar_select 0, %s6, %s4
  $region1: #{tpu_custom_call.1} parent=0
    #allocation3 [shape = 'u8[8192]{0}', space=vmem, size = 0x2000, scoped, tag = 'input window, operand 0, single buffered']
    #allocation4 [shape = 's32[1]{0}', space=sflag, size = 0x4, scoped, tag = 'scoped memory for tpu_custom_call.1']
    #allocation5 [shape = 's32[1]{0}', space=sflag, size = 0x4, scoped, tag = 'scoped memory for tpu_custom_call.1']
    #allocation6 [shape = 'u8[65536]{0}', space=vmem, size = 0x10000, scoped, tag = 'input window, operand 1, single buffered']
    #allocation7 [shape = 's32[1]{0}', space=sflag, size = 0x4, scoped, tag = 'scoped memory for tpu_custom_call.1']
    #allocation8 [shape = 'u8[8192]{0}', space=vmem, size = 0x2000, scoped, tag = 'output window, operand 0, single buffered']
    %8 = vsyncpa [#allocation4], 0
    %9 = vsyncpa [#allocation7], 0
    %10 = vsyncpa [#allocation5], 0
    // Predicated region
    $region2: #{tpu_custom_call.1} parent=1 // pred_check
      _
    $region3: #{tpu_custom_call.1} parent=1 // pred_check_branch
      %12 = sbr.rel (0) target = $region5
    $region4: #{tpu_custom_call.1} parent=1 // pred_region
      %s14 = ssub.s32 256, 256
      %15 = vsyncadd [#allocation4], %s14
      %s16 = sshll.u32 [#allocation3], 4
      %s17 = int_to_ptr.vmem [resolvable:$true] %s16
      %22 = dma.hbm_to_vmem [thread:$0]  %s0, 256, %s17, [#allocation4], 128, 128, 8
    $region5: #{tpu_custom_call.1} parent=1 // pred_fallthru
      _
    // Predicated region
    $region6: #{tpu_custom_call.1} parent=1 // pred_check
      _
    $region7: #{tpu_custom_call.1} parent=1 // pred_check_branch
      %24 = sbr.rel (0) target = $region9
    $region8: #{tpu_custom_call.1} parent=1 // pred_region
      %s26 = ssub.s32 2048, 2048
      %27 = vsyncadd [#allocation7], %s26
      %s28 = sshll.u32 [#allocation6], 4
      %s29 = int_to_ptr.vmem [resolvable:$true] %s28
      %34 = dma.hbm_to_vmem [thread:$0]  %s1, 2048, %s29, [#allocation7], 128, 128, 8
    $region9: #{tpu_custom_call.1} parent=1 // pred_fallthru
      _
    // Predicated region
    $region10: #{tpu_custom_call.1} parent=1 // pred_check
      _
    $region11: #{tpu_custom_call.1} parent=1 // pred_check_branch
      %36 = sbr.rel (0) target = $region13
    $region12: #{tpu_custom_call.1} parent=1 // pred_region
      _
    $region13: #{tpu_custom_call.1} parent=1 // pred_fallthru
      _
    // Predicated region
    $region14: #{tpu_custom_call.1} parent=1 // pred_check
      _
    $region15: #{tpu_custom_call.1} parent=1 // pred_check_branch
      %38 = sbr.rel (0) target = $region17
    $region16: #{tpu_custom_call.1} parent=1 // pred_region
      %39 = dma.done [#allocation4], 256
    $region17: #{tpu_custom_call.1} parent=1 // pred_fallthru
      _
    // Predicated region
    $region18: #{tpu_custom_call.1} parent=1 // pred_check
      _
    $region19: #{tpu_custom_call.1} parent=1 // pred_check_branch
      %41 = sbr.rel (0) target = $region21
    $region20: #{tpu_custom_call.1} parent=1 // pred_region
      %42 = dma.done [#allocation7], 2048
    $region21: #{tpu_custom_call.1} parent=1 // pred_fallthru
      _
    %p43 = scmp.eq.s32.totalorder 0, 0
    // Predicated region
    $region22: #{tpu_custom_call.1} parent=1 // pred_check
      %p44 = pneg %p43
    $region23: #{tpu_custom_call.1} parent=1 // pred_check_branch
      %46 = sbr.rel (%p44) target = $region25
    $region24: #{tpu_custom_call.1} parent=1 // pred_region
      %47 = vst [vmem:[#allocation2] sm:$0xff] 0.0
      %48 = vst [vmem:[#allocation2 + $0x8] sm:$0xff] 0.0
    $region25: #{tpu_custom_call.1} parent=1 // pred_fallthru
      _
    %v49 = vld [vmem:[#allocation2] sm:$0xff]
    %v50 = vld [vmem:[#allocation2 + $0x8] sm:$0xff]
    %v51 = vld [vmem:[#allocation3] sm:$0xff]
    %v52 = vld [vmem:[#allocation3 + $0x8] sm:$0xff]
    %v53 = vld [vmem:[#allocation6] sm:$0xff]
    %v54 = vld [vmem:[#allocation6 + $0x8] sm:$0xff]
    %v55 = vld [vmem:[#allocation6 + $0x10] sm:$0xff]
    %v56 = vld [vmem:[#allocation6 + $0x18] sm:$0xff]
    %v57 = vld [vmem:[#allocation6 + $0x20] sm:$0xff]
    %v58 = vld [vmem:[#allocation6 + $0x28] sm:$0xff]
    %v59 = vld [vmem:[#allocation6 + $0x30] sm:$0xff]
    %v60 = vld [vmem:[#allocation6 + $0x38] sm:$0xff]
    %v61 = vld [vmem:[#allocation6 + $0x40] sm:$0xff]
    %v62 = vld [vmem:[#allocation6 + $0x48] sm:$0xff]
    %v63 = vld [vmem:[#allocation6 + $0x50] sm:$0xff]
    %v64 = vld [vmem:[#allocation6 + $0x58] sm:$0xff]
    %v65 = vld [vmem:[#allocation6 + $0x60] sm:$0xff]
    %v66 = vld [vmem:[#allocation6 + $0x68] sm:$0xff]
    %v67 = vld [vmem:[#allocation6 + $0x70] sm:$0xff]
    %v68 = vld [vmem:[#allocation6 + $0x78] sm:$0xff]
    %69 = vmatprep.subr.mxu0 0.0
    %70 = vmatpush1.msra.mxu0 %v53
    %71 = vmatprep.subr.mxu0 0.0
    %72 = vmatpush1.msra.mxu0 %v54
    %73 = vmatprep.subr.mxu0 0.0
    %74 = vmatpush1.msra.mxu0 %v55
    %75 = vmatprep.subr.mxu0 0.0
    %76 = vmatpush1.msra.mxu0 %v56
    %77 = vmatprep.subr.mxu0 0.0
    %78 = vmatpush1.msra.mxu0 %v57
    %79 = vmatprep.subr.mxu0 0.0
    %80 = vmatpush1.msra.mxu0 %v58
    %81 = vmatprep.subr.mxu0 0.0
    %82 = vmatpush1.msra.mxu0 %v59
    %83 = vmatprep.subr.mxu0 0.0
    %84 = vmatpush1.msra.mxu0 %v60
    %85 = vmatprep.subr.mxu0 0.0
    %86 = vmatpush1.msra.mxu0 %v61
    %87 = vmatprep.subr.mxu0 0.0
    %88 = vmatpush1.msra.mxu0 %v62
    %89 = vmatprep.subr.mxu0 0.0
    %90 = vmatpush1.msra.mxu0 %v63
    %91 = vmatprep.subr.mxu0 0.0
    %92 = vmatpush1.msra.mxu0 %v64
    %93 = vmatprep.subr.mxu0 0.0
    %94 = vmatpush1.msra.mxu0 %v65
    %95 = vmatprep.subr.mxu0 0.0
    %96 = vmatpush1.msra.mxu0 %v66
    %97 = vmatprep.subr.mxu0 0.0
    %98 = vmatpush1.msra.mxu0 %v67
    %99 = vmatprep.subr.mxu0 0.0
    %100 = vmatpush1.msra.mxu0 %v68
    %101 = vmatprep.subr.mxu0 0.0
    %102 = vmatpush1.msra.mxu0 0.0
    %103 = vmatprep.subr.mxu0 0.0
    %104 = vmatpush1.msra.mxu0 0.0
    %105 = vmatprep.subr.mxu0 0.0
    %106 = vmatpush1.msra.mxu0 0.0
    %107 = vmatprep.subr.mxu0 0.0
    %108 = vmatpush1.msra.mxu0 0.0
    %109 = vmatprep.subr.mxu0 0.0
    %110 = vmatpush1.msra.mxu0 0.0
    %111 = vmatprep.subr.mxu0 0.0
    %112 = vmatpush1.msra.mxu0 0.0
    %113 = vmatprep.subr.mxu0 0.0
    %114 = vmatpush1.msra.mxu0 0.0
    %115 = vmatprep.subr.mxu0 0.0
    %116 = vmatpush1.msra.mxu0 0.0
    %117 = vmatprep.subr.mxu0 0.0
    %118 = vmatpush1.msra.mxu0 0.0
    %119 = vmatprep.subr.mxu0 0.0
    %120 = vmatpush1.msra.mxu0 0.0
    %121 = vmatprep.subr.mxu0 0.0
    %122 = vmatpush1.msra.mxu0 0.0
    %123 = vmatprep.subr.mxu0 0.0
    %124 = vmatpush1.msra.mxu0 0.0
    %125 = vmatprep.subr.mxu0 0.0
    %126 = vmatpush1.msra.mxu0 0.0
    %127 = vmatprep.subr.mxu0 0.0
    %128 = vmatpush1.msra.mxu0 0.0
    %129 = vmatprep.subr.mxu0 0.0
    %130 = vmatpush1.msra.mxu0 0.0
    %131 = vmatprep.subr.mxu0 0.0
    %132 = vmatpush1.msra.mxu0 0.0
    %133 = vmatprep.mubr.f32.mxu0 0.0
    %134 = vmatmul.mubr.f32.gmra.mrb[0].mxu0 %v51
    %v135 = vpop.f32.mrb[0].mxu0
    %v136 = vadd.f32 0.0, %v135
    %v137 = vpop.f32.mrb[0].mxu0
    %138 = vmatprep.mubr.f32.mxu0 0.0
    %139 = vmatmul.mubr.f32.gmra.mrb[0].mxu0 %v52
    %v140 = vpop.f32.mrb[0].mxu0
    %v141 = vadd.f32 0.0, %v140
    %v142 = vpop.f32.mrb[0].mxu0
    %143 = vdwg.mxu0
    %v144 = vadd.f32 %v49, %v136
    %v145 = vadd.f32 %v50, %v141
    %146 = vst [vmem:[#allocation2] sm:$0xff] %v144
    %147 = vst [vmem:[#allocation2 + $0x8] sm:$0xff] %v145
    // Predicated region
    $region26: #{tpu_custom_call.1} parent=1 // pred_check
      %p148 = pneg %p43
    $region27: #{tpu_custom_call.1} parent=1 // pred_check_branch
      %150 = sbr.rel (%p148) target = $region29
    $region28: #{tpu_custom_call.1} parent=1 // pred_region
      %v151 = vld [vmem:[#allocation2] sm:$0xff]
      %v152 = vld [vmem:[#allocation2 + $0x8] sm:$0xff]
      %v153 = vld [vmem:[%s2] sm:$0x1]
      %v155 = vlaneseq
      %v156 = vshrl.u32 %v155, 7
      %v157 = vsub.s32 0, %v156
      %v158 = vrot.slane %v153, %v157
      %v160 = vadd.f32 %v151, %v158
      %v161 = vadd.f32 %v152, %v158
      %162 = vst [vmem:[#allocation8] sm:$0xff] %v160
      %163 = vst [vmem:[#allocation8 + $0x8] sm:$0xff] %v161
    $region29: #{tpu_custom_call.1} parent=1 // pred_fallthru
      _
    // Predicated region
    $region30: #{tpu_custom_call.1} parent=1 // pred_check
      _
    $region31: #{tpu_custom_call.1} parent=1 // pred_check_branch
      %165 = sbr.rel (0) target = $region33
    $region32: #{tpu_custom_call.1} parent=1 // pred_region
      %s167 = ssub.s32 256, 256
      %168 = vsyncadd [#allocation5], %s167
      %s169 = sshll.u32 [#allocation8], 4
      %s170 = int_to_ptr.vmem [resolvable:$true] %s169
      %175 = dma.vmem_to_hbm [thread:$0]  %s170, 256, %s3, [#allocation5], 128, 128, 8
    $region33: #{tpu_custom_call.1} parent=1 // pred_fallthru
      _
    // Predicated region
    $region34: #{tpu_custom_call.1} parent=1 // pred_check
      _
    $region35: #{tpu_custom_call.1} parent=1 // pred_check_branch
      %177 = sbr.rel (0) target = $region37
    $region36: #{tpu_custom_call.1} parent=1 // pred_region
      %178 = dma.done [#allocation5], 256
    $region37: #{tpu_custom_call.1} parent=1 // pred_fallthru
      _
    %179 = vsyncpa [#allocation4], 1
    %180 = vsyncpa [#allocation7], 1
    %181 = vsyncpa [#allocation5], 1

</llo_original>
